<compile_context>
chip_gen: v7x
topology: tpu7x:2x2x1
jax: 0.10.0
libtpu: 0.0.40
codegen_flags: <defaults>
</compile_context>

<pallas_src>
import math

import jax
import jax.numpy as jnp
from jax.experimental import pallas as pl
from jax.experimental.pallas import tpu as pltpu


# ----------------------------------------------------------------------------
# Parameter setup (plain JAX glue): nn.Linear(d_model, vocab) weights.
# ----------------------------------------------------------------------------
def init_generator_params(key, d_model, vocab, dtype=jnp.float32):
    kw, kb = jax.random.split(key)
    bound = 1.0 / math.sqrt(d_model)  # nn.Linear default init range
    weight = jax.random.uniform(kw, (vocab, d_model), dtype, -bound, bound)
    bias = jax.random.uniform(kb, (vocab,), dtype, -bound, bound)
    return weight, bias


# ----------------------------------------------------------------------------
# Pallas kernel: out = log_softmax(x @ W^T + b, axis=-1) for one row tile.
# ----------------------------------------------------------------------------
def _generator_kernel(x_ref, wt_ref, b_ref, o_ref):
    # Logits on the MXU with f32 accumulation.
    z = jnp.dot(
        x_ref[...].astype(jnp.float32),
        wt_ref[...].astype(jnp.float32),
        preferred_element_type=jnp.float32,
    )
    z = z + b_ref[...]  # bias block is (1, Vp) f32; padded cols hold -1e30

    # Numerically stable log-softmax along the vocab (lane) axis.
    m = jnp.max(z, axis=-1, keepdims=True)
    e = jnp.exp(z - m)
    lse = m + jnp.log(jnp.sum(e, axis=-1, keepdims=True))
    o_ref[...] = (z - lse).astype(o_ref.dtype)


# ----------------------------------------------------------------------------
# Wrapper
# ----------------------------------------------------------------------------
def generator_forward(x, weight, bias, *, row_tile=256):
    """x: (..., d_model); weight: (vocab, d_model); bias: (vocab,)."""
    *lead, D = x.shape
    V = weight.shape[0]
    M = math.prod(lead) if lead else 1
    x2 = x.reshape(M, D)

    # Lane-dense vocab: pad to a multiple of 128. Padded logits get a very
    # negative bias so they never affect the normalizer.
    Vp = max(128, ((V + 127) // 128) * 128)
    wt = jnp.transpose(weight).astype(x.dtype)  # (D, V)
    b2 = bias.astype(jnp.float32)
    if Vp != V:
        wt = jnp.pad(wt, ((0, 0), (0, Vp - V)))
        b2 = jnp.pad(b2, (0, Vp - V), constant_values=-1e30)
    b2 = b2.reshape(1, Vp)

    # Row tiling: pad rows to a multiple of 8 (sublane) and pick a tile that
    # divides the padded row count.
    Mp = ((M + 7) // 8) * 8
    if Mp != M:
        x2 = jnp.pad(x2, ((0, Mp - M), (0, 0)))
    tm = min(row_tile, Mp)
    while Mp % tm != 0:
        tm //= 2

    # VMEM budget: double-buffered x/out tiles + resident W^T and bias.
    blk_bytes = 4 * (2 * tm * D + D * Vp + Vp + 2 * tm * Vp)
    vmem_limit = max(blk_bytes + (4 << 20), 16 << 20)

    out = pl.pallas_call(
        _generator_kernel,
        out_shape=jax.ShapeDtypeStruct((Mp, Vp), x.dtype),
        grid=(Mp // tm,),
        in_specs=[
            pl.BlockSpec((tm, D), lambda i: (i, 0)),    # row tile of x
            pl.BlockSpec((D, Vp), lambda i: (0, 0)),    # W^T, resident across tiles
            pl.BlockSpec((1, Vp), lambda i: (0, 0)),    # bias, resident
        ],
        out_specs=pl.BlockSpec((tm, Vp), lambda i: (i, 0)),
        compiler_params=pltpu.CompilerParams(
            dimension_semantics=("parallel",),
            vmem_limit_bytes=int(vmem_limit),
        ),
    )(x2, wt, b2)

    out = out[:M, :V]
    return out.reshape(*lead, V)


# ----------------------------------------------------------------------------
# Demo / smoke test
# ----------------------------------------------------------------------------
if __name__ == "__main__":
    B, S, D_MODEL, VOCAB = 2, 8, 32, 100  # vocab deliberately not 128-aligned

    key = jax.random.PRNGKey(0)
    kx, kp = jax.random.split(key)
    x = jax.random.normal(kx, (B, S, D_MODEL), dtype=jnp.float32)
    weight, bias = init_generator_params(kp, D_MODEL, VOCAB, dtype=jnp.float32)

    out = generator_forward(x, weight, bias)
    out = jax.block_until_ready(out)
    assert out.shape == (B, S, VOCAB), out.shape

    # Reference: log_softmax(x @ W^T + b, axis=-1) in plain JAX.
    ref = jax.nn.log_softmax(
        jnp.einsum("bsd,vd->bsv", x, weight) + bias[None, None, :], axis=-1
    )
    assert jnp.allclose(out, ref, atol=1e-5, rtol=1e-5), "log_softmax mismatch"
    # Rows of a log-softmax must exp-sum to 1.
    assert jnp.allclose(jnp.sum(jnp.exp(out), axis=-1), 1.0, atol=1e-5)

    print("KERNEL_OK")
</pallas_src>

<mosaic_0001>
module attributes {stable_mosaic.version = 11 : i64} {
  func.func @_generator_kernel(%arg0: i32, %arg1: memref<16x32xf32, #tpu.memory_space<vmem>>, %arg2: memref<32x128xf32, #tpu.memory_space<vmem>>, %arg3: memref<1x128xf32, #tpu.memory_space<vmem>>, %arg4: memref<16x128xf32, #tpu.memory_space<vmem>>) attributes {dimension_semantics = [#tpu.dimension_semantics<parallel>], iteration_bounds = array<i64: 1>, scalar_prefetch = 0 : i64, scratch_operands = 0 : i64, tpu.core_type = #tpu.core_type<tc>, window_params = [{transform_indices = @transform_0, window_bounds = array<i64: 16, 32>}, {pipeline_mode = #tpu.pipeline_mode<synchronous>, transform_indices = @transform_1, window_bounds = array<i64: 32, 128>}, {pipeline_mode = #tpu.pipeline_mode<synchronous>, transform_indices = @transform_2, window_bounds = array<i64: 1, 128>}, {transform_indices = @transform_3, window_bounds = array<i64: 16, 128>}]} {
    %c0 = arith.constant 0 : index
    %c0_0 = arith.constant 0 : index
    %0 = vector.load %arg1[%c0, %c0_0] : memref<16x32xf32, #tpu.memory_space<vmem>>, vector<16x32xf32>
    %c0_1 = arith.constant 0 : index
    %c0_2 = arith.constant 0 : index
    %1 = vector.load %arg2[%c0_1, %c0_2] : memref<32x128xf32, #tpu.memory_space<vmem>>, vector<32x128xf32>
    %cst = arith.constant dense<0.000000e+00> : vector<16x128xf32>
    %2 = tpu.matmul %0, %1, %cst {dimension_numbers = #tpu.dot_dimension_numbers<[1], [0], [0], [1], [0, 0, 1, 1], [], []>} : vector<16x32xf32>, vector<32x128xf32>, vector<16x128xf32> -> vector<16x128xf32>
    %c0_3 = arith.constant 0 : index
    %c0_4 = arith.constant 0 : index
    %3 = vector.load %arg3[%c0_3, %c0_4] : memref<1x128xf32, #tpu.memory_space<vmem>>, vector<1x128xf32>
    %4 = vector.broadcast %3 : vector<1x128xf32> to vector<16x128xf32>
    %5 = arith.addf %2, %4 : vector<16x128xf32>
    %cst_5 = arith.constant dense<0xFF800000> : vector<16xf32>
    %6 = vector.multi_reduction <maximumf>, %5, %cst_5 [1] : vector<16x128xf32> to vector<16xf32>
    %7 = vector.shape_cast %6 : vector<16xf32> to vector<16x1xf32>
    %8 = vector.broadcast %7 : vector<16x1xf32> to vector<16x128xf32>
    %9 = arith.subf %5, %8 : vector<16x128xf32>
    %10 = math.exp %9 : vector<16x128xf32>
    %cst_6 = arith.constant dense<0.000000e+00> : vector<16xf32>
    %11 = vector.multi_reduction <add>, %10, %cst_6 [1] : vector<16x128xf32> to vector<16xf32>
    %12 = vector.shape_cast %11 : vector<16xf32> to vector<16x1xf32>
    %13 = math.log %12 : vector<16x1xf32>
    %14 = arith.addf %7, %13 : vector<16x1xf32>
    %15 = vector.broadcast %14 : vector<16x1xf32> to vector<16x128xf32>
    %16 = arith.subf %5, %15 : vector<16x128xf32>
    %c0_7 = arith.constant 0 : index
    %c0_8 = arith.constant 0 : index
    %17 = vector.load %arg4[%c0_7, %c0_8] : memref<16x128xf32, #tpu.memory_space<vmem>>, vector<16x128xf32>
    tpu.vector_store %arg4[%c0_7, %c0_8], %16 {strides = array<i32>} : memref<16x128xf32, #tpu.memory_space<vmem>>, vector<16x128xf32>,
    return
  }
  func.func @transform_0(%arg0: i32) -> (i32, i32) {
    %c0_i32 = arith.constant 0 : i32
    %c0_i32_0 = arith.constant 0 : i32
    return %arg0, %c0_i32 : i32, i32
  }
  func.func @transform_1(%arg0: i32) -> (i32, i32) {
    %c0_i32 = arith.constant 0 : i32
    %c0_i32_0 = arith.constant 0 : i32
    %c0_i32_1 = arith.constant 0 : i32
    return %c0_i32, %c0_i32_0 : i32, i32
  }
  func.func @transform_2(%arg0: i32) -> (i32, i32) {
    %c0_i32 = arith.constant 0 : i32
    %c0_i32_0 = arith.constant 0 : i32
    %c0_i32_1 = arith.constant 0 : i32
    return %c0_i32, %c0_i32_0 : i32, i32
  }
  func.func @transform_3(%arg0: i32) -> (i32, i32) {
    %c0_i32 = arith.constant 0 : i32
    %c0_i32_0 = arith.constant 0 : i32
    return %arg0, %c0_i32 : i32, i32
  }
}

</mosaic_0001>

<llo_original>
// kernel: tpu_custom_call.1
$region0: #{tpu_custom_call.1}
  #allocation0 [shape = 'u32[]', space=smem, size = 0x4, offset = 0x4, fixed_abs, tag = 'smem constant byte address 0x4 - core index']
  #allocation1 [shape = 'u32[144,128]{1,0:T(1,128)}', space=vmem, size = 0x12000, scoped, tag = 'internal scratch']
  %s0 = inlined_call_operand.hbm [shape: f32[16,32], index: 0, kind: input, shape index: {}]
  %s1 = inlined_call_operand.hbm [shape: f32[32,128], index: 1, kind: input, shape index: {}]
  %s2 = inlined_call_operand.vmem [shape: f32[1,128], index: 2, kind: input, shape index: {}]
  %s3 = inlined_call_operand.hbm [shape: f32[16,128], index: 3, kind: output, shape index: {}]
  %s4 = sld [smem:[#allocation0]]
  $region30: #{tpu_custom_call.1} parent=0
    _
  %s6 = ssub.s32 1, %s4
  %s7 = scalar_select 0, %s6, %s4
  $region1: #{tpu_custom_call.1} parent=0
    #allocation2 [shape = 'u8[8192]{0}', space=vmem, size = 0x2000, scoped, tag = 'input window, operand 0, single buffered']
    #allocation3 [shape = 's32[1]{0}', space=sflag, size = 0x4, scoped, tag = 'scoped memory for tpu_custom_call.1']
    #allocation4 [shape = 's32[1]{0}', space=sflag, size = 0x4, scoped, tag = 'scoped memory for tpu_custom_call.1']
    #allocation5 [shape = 'u8[16384]{0}', space=vmem, size = 0x4000, scoped, tag = 'input window, operand 1, single buffered']
    #allocation6 [shape = 's32[1]{0}', space=sflag, size = 0x4, scoped, tag = 'scoped memory for tpu_custom_call.1']
    #allocation7 [shape = 'u8[8192]{0}', space=vmem, size = 0x2000, scoped, tag = 'output window, operand 0, single buffered']
    %8 = vsyncpa [#allocation3], 0
    %9 = vsyncpa [#allocation6], 0
    %10 = vsyncpa [#allocation4], 0
    // Predicated region
    $region2: #{tpu_custom_call.1} parent=1 // pred_check
      _
    $region3: #{tpu_custom_call.1} parent=1 // pred_check_branch
      %12 = sbr.rel (0) target = $region5
    $region4: #{tpu_custom_call.1} parent=1 // pred_region
      %s14 = ssub.s32 256, 256
      %15 = vsyncadd [#allocation3], %s14
      %s16 = sshll.u32 [#allocation2], 4
      %s17 = int_to_ptr.vmem [resolvable:$true] %s16
      %22 = dma.hbm_to_vmem [thread:$0]  %s0, 256, %s17, [#allocation3], 128, 128, 8
    $region5: #{tpu_custom_call.1} parent=1 // pred_fallthru
      _
    // Predicated region
    $region6: #{tpu_custom_call.1} parent=1 // pred_check
      _
    $region7: #{tpu_custom_call.1} parent=1 // pred_check_branch
      %24 = sbr.rel (0) target = $region9
    $region8: #{tpu_custom_call.1} parent=1 // pred_region
      %s26 = ssub.s32 512, 512
      %27 = vsyncadd [#allocation6], %s26
      %s28 = sshll.u32 [#allocation5], 4
      %s29 = int_to_ptr.vmem [resolvable:$true] %s28
      %34 = dma.hbm_to_vmem [thread:$0]  %s1, 512, %s29, [#allocation6], 128, 128, 8
    $region9: #{tpu_custom_call.1} parent=1 // pred_fallthru
      _
    // Predicated region
    $region10: #{tpu_custom_call.1} parent=1 // pred_check
      _
    $region11: #{tpu_custom_call.1} parent=1 // pred_check_branch
      %36 = sbr.rel (0) target = $region13
    $region12: #{tpu_custom_call.1} parent=1 // pred_region
      _
    $region13: #{tpu_custom_call.1} parent=1 // pred_fallthru
      _
    // Predicated region
    $region14: #{tpu_custom_call.1} parent=1 // pred_check
      _
    $region15: #{tpu_custom_call.1} parent=1 // pred_check_branch
      %38 = sbr.rel (0) target = $region17
    $region16: #{tpu_custom_call.1} parent=1 // pred_region
      %39 = dma.done [#allocation3], 256
    $region17: #{tpu_custom_call.1} parent=1 // pred_fallthru
      _
    // Predicated region
    $region18: #{tpu_custom_call.1} parent=1 // pred_check
      _
    $region19: #{tpu_custom_call.1} parent=1 // pred_check_branch
      %41 = sbr.rel (0) target = $region21
    $region20: #{tpu_custom_call.1} parent=1 // pred_region
      %42 = dma.done [#allocation6], 512
    $region21: #{tpu_custom_call.1} parent=1 // pred_fallthru
      _
    %v43 = vld [vmem:[#allocation2] sm:$0xff]
    %v44 = vld [vmem:[#allocation2 + $0x8] sm:$0xff]
    %v45 = vld [vmem:[#allocation5] sm:$0xff]
    %v46 = vld [vmem:[#allocation5 + $0x8] sm:$0xff]
    %v47 = vld [vmem:[#allocation5 + $0x10] sm:$0xff]
    %v48 = vld [vmem:[#allocation5 + $0x18] sm:$0xff]
    %v49 = vld [vmem:[%s2] sm:$0x1]
    %v51 = vlaneseq
    %v52 = vshrl.u32 %v51, 7
    %v53 = vsub.s32 0, %v52
    %v54 = vrot.slane %v49, %v53
    %vm56 = vcmask 261120
    %v58 = vsel %vm56, %v43, 0
    %v61 = vsel %vm56, %v44, 0
    %63 = vmatprep.subr.mxu0 0.0
    %64 = vmatpush1.msra.mxu0 %v45
    %65 = vmatprep.subr.mxu0 0.0
    %66 = vmatpush1.msra.mxu0 %v46
    %67 = vmatprep.subr.mxu0 0.0
    %68 = vmatpush1.msra.mxu0 %v47
    %69 = vmatprep.subr.mxu0 0.0
    %70 = vmatpush1.msra.mxu0 %v48
    %71 = vmatprep.subr.mxu0 0.0
    %72 = vmatpush1.msra.mxu0 0.0
    %73 = vmatprep.subr.mxu0 0.0
    %74 = vmatpush1.msra.mxu0 0.0
    %75 = vmatprep.subr.mxu0 0.0
    %76 = vmatpush1.msra.mxu0 0.0
    %77 = vmatprep.subr.mxu0 0.0
    %78 = vmatpush1.msra.mxu0 0.0
    %79 = vmatprep.subr.mxu0 0.0
    %80 = vmatpush1.msra.mxu0 0.0
    %81 = vmatprep.subr.mxu0 0.0
    %82 = vmatpush1.msra.mxu0 0.0
    %83 = vmatprep.subr.mxu0 0.0
    %84 = vmatpush1.msra.mxu0 0.0
    %85 = vmatprep.subr.mxu0 0.0
    %86 = vmatpush1.msra.mxu0 0.0
    %87 = vmatprep.subr.mxu0 0.0
    %88 = vmatpush1.msra.mxu0 0.0
    %89 = vmatprep.subr.mxu0 0.0
    %90 = vmatpush1.msra.mxu0 0.0
    %91 = vmatprep.subr.mxu0 0.0
    %92 = vmatpush1.msra.mxu0 0.0
    %93 = vmatprep.subr.mxu0 0.0
    %94 = vmatpush1.msra.mxu0 0.0
    %95 = vmatprep.subr.mxu0 0.0
    %96 = vmatpush1.msra.mxu0 0.0
    %97 = vmatprep.subr.mxu0 0.0
    %98 = vmatpush1.msra.mxu0 0.0
    %99 = vmatprep.subr.mxu0 0.0
    %100 = vmatpush1.msra.mxu0 0.0
    %101 = vmatprep.subr.mxu0 0.0
    %102 = vmatpush1.msra.mxu0 0.0
    %103 = vmatprep.subr.mxu0 0.0
    %104 = vmatpush1.msra.mxu0 0.0
    %105 = vmatprep.subr.mxu0 0.0
    %106 = vmatpush1.msra.mxu0 0.0
    %107 = vmatprep.subr.mxu0 0.0
    %108 = vmatpush1.msra.mxu0 0.0
    %109 = vmatprep.subr.mxu0 0.0
    %110 = vmatpush1.msra.mxu0 0.0
    %111 = vmatprep.subr.mxu0 0.0
    %112 = vmatpush1.msra.mxu0 0.0
    %113 = vmatprep.subr.mxu0 0.0
    %114 = vmatpush1.msra.mxu0 0.0
    %115 = vmatprep.subr.mxu0 0.0
    %116 = vmatpush1.msra.mxu0 0.0
    %117 = vmatprep.subr.mxu0 0.0
    %118 = vmatpush1.msra.mxu0 0.0
    %119 = vmatprep.subr.mxu0 0.0
    %120 = vmatpush1.msra.mxu0 0.0
    %121 = vmatprep.subr.mxu0 0.0
    %122 = vmatpush1.msra.mxu0 0.0
    %123 = vmatprep.subr.mxu0 0.0
    %124 = vmatpush1.msra.mxu0 0.0
    %125 = vmatprep.subr.mxu0 0.0
    %126 = vmatpush1.msra.mxu0 0.0
    %127 = vmatprep.mubr.f32.mxu0 0.0
    %128 = vmatmul.mubr.f32.gmra.mrb[0].mxu0 %v58
    %v129 = vpop.f32.mrb[0].mxu0
    %v130 = vadd.f32 %v54, %v129
    %v131 = vpop.f32.mrb[0].mxu0
    %132 = vmatprep.mubr.f32.mxu0 0.0
    %133 = vmatmul.mubr.f32.gmra.mrb[0].mxu0 %v61
    %v134 = vpop.f32.mrb[0].mxu0
    %v135 = vadd.f32 %v54, %v134
    %v136 = vpop.f32.mrb[0].mxu0
    %137 = vdwg.mxu0
    %138 = vmax.xlane.f32.xlu0 %v130
    %v139 = vpop.xlane.xlu0 %138
    %140 = vmax.xlane.f32.xlu0 %v135
    %v141 = vpop.xlane.xlu0 %140
    %v142 = vsub.f32 %v130, %v139
    %v143 = vsub.f32 %v135, %v141
    %v144 = vmul.f32 %v142, 1.442695
    %v145 = vpow.pop %v144
    %v146 = vmul.f32 %v143, 1.442695
    %v147 = vpow.pop %v146
    %148 = vadd.xlane.f32.xlu0 %v145
    %v149 = vpop.xlane.xlu0 %148
    %150 = vadd.xlane.f32.xlu0 %v147
    %v151 = vpop.xlane.xlu0 %150
    %v152 = vlog2.pop %v149
    %v153 = vmul.f32 %v152, 0.6931472
    %v154 = vlog2.pop %v151
    %v155 = vmul.f32 %v154, 0.6931472
    %v156 = vadd.f32 %v139, %v153
    %v157 = vadd.f32 %v141, %v155
    %v158 = vsub.f32 %v130, %v156
    %v159 = vsub.f32 %v135, %v157
    %160 = vst [vmem:[#allocation7] sm:$0xff] %v158
    %161 = vst [vmem:[#allocation7 + $0x8] sm:$0xff] %v159
    // Predicated region
    $region22: #{tpu_custom_call.1} parent=1 // pred_check
      _
    $region23: #{tpu_custom_call.1} parent=1 // pred_check_branch
      %163 = sbr.rel (0) target = $region25
    $region24: #{tpu_custom_call.1} parent=1 // pred_region
      %s165 = ssub.s32 256, 256
      %166 = vsyncadd [#allocation4], %s165
      %s167 = sshll.u32 [#allocation7], 4
      %s168 = int_to_ptr.vmem [resolvable:$true] %s167
      %173 = dma.vmem_to_hbm [thread:$0]  %s168, 256, %s3, [#allocation4], 128, 128, 8
    $region25: #{tpu_custom_call.1} parent=1 // pred_fallthru
      _
    // Predicated region
    $region26: #{tpu_custom_call.1} parent=1 // pred_check
      _
    $region27: #{tpu_custom_call.1} parent=1 // pred_check_branch
      %175 = sbr.rel (0) target = $region29
    $region28: #{tpu_custom_call.1} parent=1 // pred_region
      %176 = dma.done [#allocation4], 256
    $region29: #{tpu_custom_call.1} parent=1 // pred_fallthru
      _
    %177 = vsyncpa [#allocation3], 1
    %178 = vsyncpa [#allocation6], 1
    %179 = vsyncpa [#allocation4], 1

</llo_original>
